<compile_context>
chip_gen: v5e
topology: v5e:2x2
jax: 0.10.0
libtpu: 0.0.40
codegen_flags: <defaults>
</compile_context>

<pallas_src>
import jax
import jax.numpy as jnp
from jax.experimental import pallas as pl
from jax.experimental.pallas import tpu as pltpu

# ---- synthetic "base_model_config" sizes (small, consistent with the module) ----
HIDDEN    = 32      # base_model_config.hidden_size
FC1       = 256
FC2       = 128
VOCAB     = 100
VOCAB_PAD = 128     # pad vocab to lane width for the one-hot gather matmul
EMB       = 16
BATCH     = 2
SEQ       = 8
SUBLANES  = 8       # pad batch rows to sublane width
LANES     = 128     # lane-dense output width


# ---------------------------------------------------------------------------
# Single fused kernel: embedding gather + encoder + MLP head + sigmoid
# ---------------------------------------------------------------------------
def fused_finetune_kernel(ids_ref, mask_ref, emb_ref,
                          we_ref, be_ref,
                          w1_ref, b1_ref,
                          w2_ref, b2_ref,
                          w3_ref, b3_ref,
                          out_ref):
    rows = out_ref.shape[0]

    # --- in-kernel embedding lookup (CLS tokens only) via one-hot matmul ----
    ids = ids_ref[...]                                              # [rows, 1] int32
    onehot = (jax.lax.broadcasted_iota(jnp.int32, (rows, VOCAB_PAD), 1)
              == ids).astype(jnp.float32)                           # [rows, VOCAB_PAD]
    cls_emb = jnp.dot(onehot, emb_ref[...],
                      preferred_element_type=jnp.float32)           # [rows, EMB]
    # NOTE: mask applied multiplicatively to the CLS embedding (synthetic
    # stand-in; not equivalent to real transformer attention masking).
    cls_emb = cls_emb * mask_ref[...]

    # --- synthetic encoder: per-token dense + tanh (CLS position only) ------
    # TODO(synk): the real base model is a pretrained HF transformer; this is
    # a deterministic synthetic stand-in producing the CLS hidden state.
    hidden = jnp.tanh(
        jnp.dot(cls_emb, we_ref[...], preferred_element_type=jnp.float32)
        + be_ref[...])                                              # [rows, HIDDEN]

    # --- classification head: fc1 -> ReLU -> fc2 -> ReLU -> fc3 -> sigmoid --
    # (nn.Dropout is the identity in eval/inference mode.)
    h = jnp.dot(hidden, w1_ref[...], preferred_element_type=jnp.float32)
    h = jnp.maximum(h + b1_ref[...], 0.0)                           # [rows, FC1]
    h = jnp.dot(h, w2_ref[...], preferred_element_type=jnp.float32)
    h = jnp.maximum(h + b2_ref[...], 0.0)                           # [rows, FC2]
    # fc3 has N=1: use a lane reduction (XLU) instead of a degenerate MXU pass.
    logit = jnp.sum(h * w3_ref[...], axis=-1, keepdims=True) + b3_ref[...]  # [rows, 1]
    prob = jax.nn.sigmoid(logit)                                    # EUP

    # Lane-dense writeback: one (8, 128) vreg, unmasked vst; wrapper slices [:B, :1].
    out_ref[...] = jnp.broadcast_to(prob, out_ref.shape)


# ---------------------------------------------------------------------------
# Wrapper: single pallas_call, no glue ops between kernels
# ---------------------------------------------------------------------------
def finetune_forward(params, input_ids, attention_mask):
    B = input_ids.shape[0]
    rows = max(SUBLANES, ((B + SUBLANES - 1) // SUBLANES) * SUBLANES)

    # Only the CLS position is consumed downstream -> gather column 0 only.
    cls_ids = input_ids[:, 0].astype(jnp.int32)
    cls_mask = attention_mask[:, 0].astype(jnp.float32)
    cls_ids = jnp.pad(cls_ids, (0, rows - B)).reshape(rows, 1)
    cls_mask = jnp.pad(cls_mask, (0, rows - B)).reshape(rows, 1)

    vmem = pl.BlockSpec(memory_space=pltpu.MemorySpace.VMEM)
    out = pl.pallas_call(
        fused_finetune_kernel,
        out_shape=jax.ShapeDtypeStruct((rows, LANES), jnp.float32),
        in_specs=[vmem] * 11,
        out_specs=vmem,
        cost_estimate=pl.CostEstimate(
            flops=2 * rows * (VOCAB_PAD * EMB + EMB * HIDDEN
                              + HIDDEN * FC1 + FC1 * FC2 + FC2),
            transcendentals=rows * (HIDDEN + 1),
            bytes_accessed=4 * (VOCAB_PAD * EMB + EMB * HIDDEN + HIDDEN * FC1
                                + FC1 * FC2 + FC2 + rows * (2 + LANES)),
        ),
    )(
        cls_ids, cls_mask,
        params["emb_table_pad"],
        params["w_enc"], params["b_enc"],
        params["w1"], params["b1"],
        params["w2"], params["b2"],
        params["w3_row"], params["b3"],
    )
    return out[:B, :1]                                 # [B, 1] probabilities in [0, 1]


# ---------------------------------------------------------------------------
# Deterministic parameter init (synthetic; no checkpoint load)
# ---------------------------------------------------------------------------
def init_params(key):
    ks = jax.random.split(key, 8)

    def dense(k, fan_in, fan_out):
        scale = 1.0 / jnp.sqrt(jnp.float32(fan_in))
        return jax.random.normal(k, (fan_in, fan_out), jnp.float32) * scale

    emb_table = jax.random.normal(ks[0], (VOCAB, EMB), jnp.float32) * 0.02
    emb_table_pad = jnp.pad(emb_table, ((0, VOCAB_PAD - VOCAB), (0, 0)))
    w3 = dense(ks[6], FC2, 1)                          # [FC2, 1]
    return {
        "emb_table_pad": emb_table_pad,                # [VOCAB_PAD, EMB]
        "w_enc": dense(ks[1], EMB, HIDDEN),
        "b_enc": jnp.zeros((1, HIDDEN), jnp.float32),
        "w1": dense(ks[2], HIDDEN, FC1),
        "b1": jax.random.normal(ks[3], (1, FC1), jnp.float32) * 0.01,
        "w2": dense(ks[4], FC1, FC2),
        "b2": jax.random.normal(ks[5], (1, FC2), jnp.float32) * 0.01,
        "w3_row": w3.T,                                # [1, FC2] row for lane reduction
        "b3": jax.random.normal(ks[7], (1, 1), jnp.float32) * 0.01,
    }


if __name__ == "__main__":
    key = jax.random.PRNGKey(0)
    k_param, k_ids = jax.random.split(key)

    params = init_params(k_param)
    input_ids = jax.random.randint(k_ids, (BATCH, SEQ), 0, VOCAB, dtype=jnp.int32)
    attention_mask = jnp.ones((BATCH, SEQ), dtype=jnp.int32)

    logits = jax.jit(finetune_forward)(params, input_ids, attention_mask)
    logits = jax.block_until_ready(logits)

    assert logits.shape == (BATCH, 1)
    assert bool(jnp.all(jnp.isfinite(logits)))
    assert bool(jnp.all((logits >= 0.0) & (logits <= 1.0)))
    print("KERNEL_OK")
</pallas_src>

<mosaic_0001>
module attributes {stable_mosaic.version = 11 : i64} {
  func.func @fused_finetune_kernel(%arg0: memref<8x1xi32, #tpu.memory_space<vmem>>, %arg1: memref<8x1xf32, #tpu.memory_space<vmem>>, %arg2: memref<128x16xf32, #tpu.memory_space<vmem>>, %arg3: memref<16x32xf32, #tpu.memory_space<vmem>>, %arg4: memref<1x32xf32, #tpu.memory_space<vmem>>, %arg5: memref<32x256xf32, #tpu.memory_space<vmem>>, %arg6: memref<1x256xf32, #tpu.memory_space<vmem>>, %arg7: memref<256x128xf32, #tpu.memory_space<vmem>>, %arg8: memref<1x128xf32, #tpu.memory_space<vmem>>, %arg9: memref<1x128xf32, #tpu.memory_space<vmem>>, %arg10: memref<1x1xf32, #tpu.memory_space<vmem>>, %arg11: memref<8x128xf32, #tpu.memory_space<vmem>>) attributes {dimension_semantics = [], scalar_prefetch = 0 : i64, scratch_operands = 0 : i64, tpu.core_type = #tpu.core_type<tc>} {
    %c0 = arith.constant 0 : index
    %c0_0 = arith.constant 0 : index
    %0 = vector.load %arg0[%c0, %c0_0] : memref<8x1xi32, #tpu.memory_space<vmem>>, vector<8x1xi32>
    %1 = tpu.iota {dimensions = array<i32: 1>} : vector<8x128xi32>
    %2 = vector.broadcast %0 : vector<8x1xi32> to vector<8x128xi32>
    %3 = arith.cmpi eq, %1, %2 : vector<8x128xi32>
    %4 = arith.extui %3 : vector<8x128xi1> to vector<8x128xi32>
    %5 = arith.sitofp %4 : vector<8x128xi32> to vector<8x128xf32>
    %c0_1 = arith.constant 0 : index
    %c0_2 = arith.constant 0 : index
    %6 = vector.load %arg2[%c0_1, %c0_2] : memref<128x16xf32, #tpu.memory_space<vmem>>, vector<128x16xf32>
    %cst = arith.constant dense<0.000000e+00> : vector<8x16xf32>
    %7 = tpu.matmul %5, %6, %cst {dimension_numbers = #tpu.dot_dimension_numbers<[1], [0], [0], [1], [0, 0, 1, 1], [], []>} : vector<8x128xf32>, vector<128x16xf32>, vector<8x16xf32> -> vector<8x16xf32>
    %c0_3 = arith.constant 0 : index
    %c0_4 = arith.constant 0 : index
    %8 = vector.load %arg1[%c0_3, %c0_4] : memref<8x1xf32, #tpu.memory_space<vmem>>, vector<8x1xf32>
    %9 = vector.broadcast %8 : vector<8x1xf32> to vector<8x16xf32>
    %10 = arith.mulf %7, %9 : vector<8x16xf32>
    %c0_5 = arith.constant 0 : index
    %c0_6 = arith.constant 0 : index
    %11 = vector.load %arg3[%c0_5, %c0_6] : memref<16x32xf32, #tpu.memory_space<vmem>>, vector<16x32xf32>
    %cst_7 = arith.constant dense<0.000000e+00> : vector<8x32xf32>
    %12 = tpu.matmul %10, %11, %cst_7 {dimension_numbers = #tpu.dot_dimension_numbers<[1], [0], [0], [1], [0, 0, 1, 1], [], []>} : vector<8x16xf32>, vector<16x32xf32>, vector<8x32xf32> -> vector<8x32xf32>
    %c0_8 = arith.constant 0 : index
    %c0_9 = arith.constant 0 : index
    %13 = vector.load %arg4[%c0_8, %c0_9] : memref<1x32xf32, #tpu.memory_space<vmem>>, vector<1x32xf32>
    %14 = vector.broadcast %13 : vector<1x32xf32> to vector<8x32xf32>
    %15 = arith.addf %12, %14 : vector<8x32xf32>
    %16 = math.tanh %15 : vector<8x32xf32>
    %c0_10 = arith.constant 0 : index
    %c0_11 = arith.constant 0 : index
    %17 = vector.load %arg5[%c0_10, %c0_11] : memref<32x256xf32, #tpu.memory_space<vmem>>, vector<32x256xf32>
    %cst_12 = arith.constant dense<0.000000e+00> : vector<8x256xf32>
    %18 = tpu.matmul %16, %17, %cst_12 {dimension_numbers = #tpu.dot_dimension_numbers<[1], [0], [0], [1], [0, 0, 1, 1], [], []>} : vector<8x32xf32>, vector<32x256xf32>, vector<8x256xf32> -> vector<8x256xf32>
    %c0_13 = arith.constant 0 : index
    %c0_14 = arith.constant 0 : index
    %19 = vector.load %arg6[%c0_13, %c0_14] : memref<1x256xf32, #tpu.memory_space<vmem>>, vector<1x256xf32>
    %20 = vector.broadcast %19 : vector<1x256xf32> to vector<8x256xf32>
    %21 = arith.addf %18, %20 : vector<8x256xf32>
    %cst_15 = arith.constant 0.000000e+00 : f32
    %22 = vector.broadcast %cst_15 : f32 to vector<8x256xf32>
    %23 = arith.maximumf %21, %22 : vector<8x256xf32>
    %c0_16 = arith.constant 0 : index
    %c0_17 = arith.constant 0 : index
    %24 = vector.load %arg7[%c0_16, %c0_17] : memref<256x128xf32, #tpu.memory_space<vmem>>, vector<256x128xf32>
    %cst_18 = arith.constant dense<0.000000e+00> : vector<8x128xf32>
    %25 = tpu.matmul %23, %24, %cst_18 {dimension_numbers = #tpu.dot_dimension_numbers<[1], [0], [0], [1], [0, 0, 1, 1], [], []>} : vector<8x256xf32>, vector<256x128xf32>, vector<8x128xf32> -> vector<8x128xf32>
    %c0_19 = arith.constant 0 : index
    %c0_20 = arith.constant 0 : index
    %26 = vector.load %arg8[%c0_19, %c0_20] : memref<1x128xf32, #tpu.memory_space<vmem>>, vector<1x128xf32>
    %27 = vector.broadcast %26 : vector<1x128xf32> to vector<8x128xf32>
    %28 = arith.addf %25, %27 : vector<8x128xf32>
    %cst_21 = arith.constant 0.000000e+00 : f32
    %29 = vector.broadcast %cst_21 : f32 to vector<8x128xf32>
    %30 = arith.maximumf %28, %29 : vector<8x128xf32>
    %c0_22 = arith.constant 0 : index
    %c0_23 = arith.constant 0 : index
    %31 = vector.load %arg9[%c0_22, %c0_23] : memref<1x128xf32, #tpu.memory_space<vmem>>, vector<1x128xf32>
    %32 = vector.broadcast %31 : vector<1x128xf32> to vector<8x128xf32>
    %33 = arith.mulf %30, %32 : vector<8x128xf32>
    %cst_24 = arith.constant dense<0.000000e+00> : vector<8xf32>
    %34 = vector.multi_reduction <add>, %33, %cst_24 [1] : vector<8x128xf32> to vector<8xf32>
    %35 = vector.shape_cast %34 : vector<8xf32> to vector<8x1xf32>
    %c0_25 = arith.constant 0 : index
    %c0_26 = arith.constant 0 : index
    %36 = vector.load %arg10[%c0_25, %c0_26] : memref<1x1xf32, #tpu.memory_space<vmem>>, vector<1x1xf32>
    %37 = vector.broadcast %36 : vector<1x1xf32> to vector<8x1xf32>
    %38 = arith.addf %35, %37 : vector<8x1xf32>
    %39 = arith.negf %38 : vector<8x1xf32>
    %40 = math.exp %39 : vector<8x1xf32>
    %cst_27 = arith.constant 1.000000e+00 : f32
    %41 = vector.broadcast %cst_27 : f32 to vector<8x1xf32>
    %42 = arith.addf %41, %40 : vector<8x1xf32>
    %43 = arith.divf %41, %42 : vector<8x1xf32>
    %44 = vector.shape_cast %43 : vector<8x1xf32> to vector<8x1xf32>
    %45 = vector.broadcast %44 : vector<8x1xf32> to vector<8x128xf32>
    %c0_28 = arith.constant 0 : index
    %c0_29 = arith.constant 0 : index
    %46 = vector.load %arg11[%c0_28, %c0_29] : memref<8x128xf32, #tpu.memory_space<vmem>>, vector<8x128xf32>
    tpu.vector_store %arg11[%c0_28, %c0_29], %45 {strides = array<i32>} : memref<8x128xf32, #tpu.memory_space<vmem>>, vector<8x128xf32>,
    return
  }
}

</mosaic_0001>

<llo_original>
// kernel: finetune_forward.1
$region0: #{finetune_forward.1}
  #allocation0 [shape = 'u32[]', space=smem, size = 0x4, offset = 0x4, fixed_abs, tag = 'smem constant byte address 0x4 - core index']
  #allocation1 [shape = 'u32[72,128]{1,0:T(1,128)}', space=vmem, size = 0x9000, scoped, tag = 'internal scratch']
  #allocation2 [shape = 'f32[1,1]{1,0:T(1,128)S(1)}', space=vmem, size = 0x200, scoped, tag = 'scoped memory for finetune_forward.1']
  %s0 = inlined_call_operand.vmem [shape: s32[8,1], index: 0, kind: input, shape index: {}]
  %s1 = inlined_call_operand.vmem [shape: f32[8,1], index: 1, kind: input, shape index: {}]
  %s2 = inlined_call_operand.vmem [shape: f32[128,16], index: 2, kind: input, shape index: {}]
  %s3 = inlined_call_operand.vmem [shape: f32[16,32], index: 3, kind: input, shape index: {}]
  %s4 = inlined_call_operand.vmem [shape: f32[1,32], index: 4, kind: input, shape index: {}]
  %s5 = inlined_call_operand.vmem [shape: f32[32,256], index: 5, kind: input, shape index: {}]
  %s6 = inlined_call_operand.vmem [shape: f32[1,256], index: 6, kind: input, shape index: {}]
  %s7 = inlined_call_operand.hbm [shape: f32[256,128], index: 7, kind: input, shape index: {}]
  %s8 = inlined_call_operand.vmem [shape: f32[1,128], index: 8, kind: input, shape index: {}]
  %s9 = inlined_call_operand.vmem [shape: f32[1,128], index: 9, kind: input, shape index: {}]
  %s10 = inlined_call_operand.<no memory space> [shape: f32[1,1], index: 10, kind: input, shape index: {}]
  %s11 = inlined_call_operand.vmem [shape: f32[8,128], index: 11, kind: output, shape index: {}]
  %s12 = sld [smem:[#allocation0]]
  $region58: #{finetune_forward.1} parent=0
    _
  %s14 = ssub.s32 1, %s12
  %s15 = scalar_select 0, %s14, %s12
  %v16 = vstv %s10
  %17 = vst [vmem:[#allocation2] sm:$0x1] %v16
  $region1: #{finetune_forward.1} parent=0
    #allocation3 [shape = 'u8[131072]{0}', space=vmem, size = 0x20000, scoped, tag = 'input window, operand 7, single buffered']
    #allocation4 [shape = 's32[1]{0}', space=sflag, size = 0x4, scoped, tag = 'scoped memory for finetune_forward.1']
    %18 = vsyncpa [#allocation4], 0
    // Predicated region
    $region2: #{finetune_forward.1} parent=1 // pred_check
      _
    $region3: #{finetune_forward.1} parent=1 // pred_check_branch
      %20 = sbr.rel (0) target = $region5
    $region4: #{finetune_forward.1} parent=1 // pred_region
      _
    $region5: #{finetune_forward.1} parent=1 // pred_fallthru
      _
    // Predicated region
    $region6: #{finetune_forward.1} parent=1 // pred_check
      _
    $region7: #{finetune_forward.1} parent=1 // pred_check_branch
      %22 = sbr.rel (0) target = $region9
    $region8: #{finetune_forward.1} parent=1 // pred_region
      _
    $region9: #{finetune_forward.1} parent=1 // pred_fallthru
      _
    // Predicated region
    $region10: #{finetune_forward.1} parent=1 // pred_check
      _
    $region11: #{finetune_forward.1} parent=1 // pred_check_branch
      %24 = sbr.rel (0) target = $region13
    $region12: #{finetune_forward.1} parent=1 // pred_region
      _
    $region13: #{finetune_forward.1} parent=1 // pred_fallthru
      _
    // Predicated region
    $region14: #{finetune_forward.1} parent=1 // pred_check
      _
    $region15: #{finetune_forward.1} parent=1 // pred_check_branch
      %26 = sbr.rel (0) target = $region17
    $region16: #{finetune_forward.1} parent=1 // pred_region
      _
    $region17: #{finetune_forward.1} parent=1 // pred_fallthru
      _
    // Predicated region
    $region18: #{finetune_forward.1} parent=1 // pred_check
      _
    $region19: #{finetune_forward.1} parent=1 // pred_check_branch
      %28 = sbr.rel (0) target = $region21
    $region20: #{finetune_forward.1} parent=1 // pred_region
      _
    $region21: #{finetune_forward.1} parent=1 // pred_fallthru
      _
    // Predicated region
    $region22: #{finetune_forward.1} parent=1 // pred_check
      _
    $region23: #{finetune_forward.1} parent=1 // pred_check_branch
      %30 = sbr.rel (0) target = $region25
    $region24: #{finetune_forward.1} parent=1 // pred_region
      _
    $region25: #{finetune_forward.1} parent=1 // pred_fallthru
      _
    // Predicated region
    $region26: #{finetune_forward.1} parent=1 // pred_check
      _
    $region27: #{finetune_forward.1} parent=1 // pred_check_branch
      %32 = sbr.rel (0) target = $region29
    $region28: #{finetune_forward.1} parent=1 // pred_region
      _
    $region29: #{finetune_forward.1} parent=1 // pred_fallthru
      _
    // Predicated region
    $region30: #{finetune_forward.1} parent=1 // pred_check
      _
    $region31: #{finetune_forward.1} parent=1 // pred_check_branch
      %34 = sbr.rel (0) target = $region33
    $region32: #{finetune_forward.1} parent=1 // pred_region
      %36 = vsyncadd [#allocation4], 0
      %s37 = sshll.u32 %s7, 4
      %s38 = int_to_ptr.hbm [resolvable:$true] %s37
      %s39 = sshll.u32 [#allocation3], 4
      %s40 = int_to_ptr.vmem [resolvable:$true] %s39
      %45 = dma.hbm_to_vmem [thread:$0]  %s38, 4096, %s40, [#allocation4], 128, 128, 8
    $region33: #{finetune_forward.1} parent=1 // pred_fallthru
      _
    // Predicated region
    $region34: #{finetune_forward.1} parent=1 // pred_check
      _
    $region35: #{finetune_forward.1} parent=1 // pred_check_branch
      %47 = sbr.rel (0) target = $region37
    $region36: #{finetune_forward.1} parent=1 // pred_region
      _
    $region37: #{finetune_forward.1} parent=1 // pred_fallthru
      _
    // Predicated region
    $region38: #{finetune_forward.1} parent=1 // pred_check
      _
    $region39: #{finetune_forward.1} parent=1 // pred_check_branch
      %49 = sbr.rel (0) target = $region41
    $region40: #{finetune_forward.1} parent=1 // pred_region
      _
    $region41: #{finetune_forward.1} parent=1 // pred_fallthru
      _
    // Predicated region
    $region42: #{finetune_forward.1} parent=1 // pred_check
      _
    $region43: #{finetune_forward.1} parent=1 // pred_check_branch
      %51 = sbr.rel (0) target = $region45
    $region44: #{finetune_forward.1} parent=1 // pred_region
      _
    $region45: #{finetune_forward.1} parent=1 // pred_fallthru
      _
    // Predicated region
    $region46: #{finetune_forward.1} parent=1 // pred_check
      _
    $region47: #{finetune_forward.1} parent=1 // pred_check_branch
      %53 = sbr.rel (0) target = $region49
    $region48: #{finetune_forward.1} parent=1 // pred_region
      %55 = dma.done [#allocation4], 4096
    $region49: #{finetune_forward.1} parent=1 // pred_fallthru
      _
    %v56 = vld [vmem:[%s0] sm:$0xff]
    %v57 = vlaneseq
    %v58 = vand.u32 %v57, 127
    %59 = vset.pattern.permute.xlu0 0
    %60 = vperm.xlu0 %59, %v56
    %v61 = vpop.permute.xlu0 %60
    %vm62 = vcmp.eq.s32.totalorder %v58, %v61
    %v63 = vsel %vm62, 1, 0
    %v64 = vcvt.s32.f32 %v63
    %v65 = vld [vmem:[%s2] sm:$0xff]
    %v66 = vld [vmem:[%s2 + $0x8] sm:$0xff]
    %v67 = vld [vmem:[%s2 + $0x10] sm:$0xff]
    %v68 = vld [vmem:[%s2 + $0x18] sm:$0xff]
    %v69 = vld [vmem:[%s2 + $0x20] sm:$0xff]
    %v70 = vld [vmem:[%s2 + $0x28] sm:$0xff]
    %v71 = vld [vmem:[%s2 + $0x30] sm:$0xff]
    %v72 = vld [vmem:[%s2 + $0x38] sm:$0xff]
    %v73 = vld [vmem:[%s2 + $0x40] sm:$0xff]
    %v74 = vld [vmem:[%s2 + $0x48] sm:$0xff]
    %v75 = vld [vmem:[%s2 + $0x50] sm:$0xff]
    %v76 = vld [vmem:[%s2 + $0x58] sm:$0xff]
    %v77 = vld [vmem:[%s2 + $0x60] sm:$0xff]
    %v78 = vld [vmem:[%s2 + $0x68] sm:$0xff]
    %v79 = vld [vmem:[%s2 + $0x70] sm:$0xff]
    %v80 = vld [vmem:[%s2 + $0x78] sm:$0xff]
    %81 = vmatpush.msra.mxu0 %v80
    %82 = vmatpush.msra.mxu0 %v79
    %83 = vmatpush.msra.mxu0 %v78
    %84 = vmatpush.msra.mxu0 %v77
    %85 = vmatpush.msra.mxu0 %v76
    %86 = vmatpush.msra.mxu0 %v75
    %87 = vmatpush.msra.mxu0 %v74
    %88 = vmatpush.msra.mxu0 %v73
    %89 = vmatpush.msra.mxu0 %v72
    %90 = vmatpush.msra.mxu0 %v71
    %91 = vmatpush.msra.mxu0 %v70
    %92 = vmatpush.msra.mxu0 %v69
    %93 = vmatpush.msra.mxu0 %v68
    %94 = vmatpush.msra.mxu0 %v67
    %95 = vmatpush.msra.mxu0 %v66
    %96 = vmatpush.msra.mxu0 %v65
    %97 = vmatmul.f32.gmra.mxu0 %v64
    %v98 = vpop.f32.mrf.mxu0
    %v99 = vadd.f32 0.0, %v98
    %100 = vdwg.mxu0
    %v101 = vld [vmem:[%s1] sm:$0xff]
    %103 = vset.pattern.permute.xlu0 0
    %104 = vperm.xlu0 %103, %v101
    %v105 = vpop.permute.xlu0 %104
    %v107 = vmul.f32 %v99, %v105
    %v108 = vld [vmem:[%s3] sm:$0xff]
    %v109 = vld [vmem:[%s3 + $0x8] sm:$0xff]
    %v110 = vld [vmem:[%s4] sm:$0x1]
    %v112 = vperm.slane %v110, 0
    %vm114 = vcmask 130048
    %v116 = vsel %vm114, %v107, 0
    %118 = vmatpush.msra.mxu0 0.0
    %119 = vmatpush.msra.mxu0 0.0
    %120 = vmatpush.msra.mxu0 0.0
    %121 = vmatpush.msra.mxu0 0.0
    %122 = vmatpush.msra.mxu0 0.0
    %123 = vmatpush.msra.mxu0 0.0
    %124 = vmatpush.msra.mxu0 0.0
    %125 = vmatpush.msra.mxu0 0.0
    %126 = vmatpush.msra.mxu0 0.0
    %127 = vmatpush.msra.mxu0 0.0
    %128 = vmatpush.msra.mxu0 0.0
    %129 = vmatpush.msra.mxu0 0.0
    %130 = vmatpush.msra.mxu0 0.0
    %131 = vmatpush.msra.mxu0 0.0
    %132 = vmatpush.msra.mxu0 %v109
    %133 = vmatpush.msra.mxu0 %v108
    %134 = vmatmul.f32.gmra.mxu0 %v116
    %v135 = vpop.f32.mrf.mxu0
    %v136 = vadd.f32 %v112, %v135
    %137 = vdwg.mxu0
    %v138 = vtanh.pop %v136
    %v139 = vld [vmem:[%s5] sm:$0xff]
    %v140 = vld [vmem:[%s5 + $0x8] sm:$0xff]
    %v141 = vld [vmem:[%s5 + $0x10] sm:$0xff]
    %v142 = vld [vmem:[%s5 + $0x18] sm:$0xff]
    %v143 = vld [vmem:[%s5 + $0x20] sm:$0xff]
    %v144 = vld [vmem:[%s5 + $0x28] sm:$0xff]
    %v145 = vld [vmem:[%s5 + $0x30] sm:$0xff]
    %v146 = vld [vmem:[%s5 + $0x38] sm:$0xff]
    %v147 = vld [vmem:[%s6] sm:$0x3]
    %v149 = vperm.slane %v147, 0
    %v150 = vperm.slane %v147, 1
    %vm153 = vcmask 261120
    %v155 = vsel %vm153, %v138, 0
    %157 = vmatpush.msra.mxu0 0.0
    %158 = vmatpush.msra.mxu0 0.0
    %159 = vmatpush.msra.mxu0 0.0
    %160 = vmatpush.msra.mxu0 0.0
    %161 = vmatpush.msra.mxu0 0.0
    %162 = vmatpush.msra.mxu0 0.0
    %163 = vmatpush.msra.mxu0 0.0
    %164 = vmatpush.msra.mxu0 0.0
    %165 = vmatpush.msra.mxu0 0.0
    %166 = vmatpush.msra.mxu0 0.0
    %167 = vmatpush.msra.mxu0 0.0
    %168 = vmatpush.msra.mxu0 0.0
    %169 = vmatpush.msra.mxu0 %v145
    %170 = vmatpush.msra.mxu0 %v143
    %171 = vmatpush.msra.mxu0 %v141
    %172 = vmatpush.msra.mxu0 %v139
    %173 = vmatmul.f32.gmra.mxu0 %v155
    %v174 = vpop.f32.mrf.mxu0
    %v175 = vadd.f32 %v149, %v174
    %176 = vdwg.mxu0
    %177 = vmatpush.msra.mxu0 0.0
    %178 = vmatpush.msra.mxu0 0.0
    %179 = vmatpush.msra.mxu0 0.0
    %180 = vmatpush.msra.mxu0 0.0
    %181 = vmatpush.msra.mxu0 0.0
    %182 = vmatpush.msra.mxu0 0.0
    %183 = vmatpush.msra.mxu0 0.0
    %184 = vmatpush.msra.mxu0 0.0
    %185 = vmatpush.msra.mxu0 0.0
    %186 = vmatpush.msra.mxu0 0.0
    %187 = vmatpush.msra.mxu0 0.0
    %188 = vmatpush.msra.mxu0 0.0
    %189 = vmatpush.msra.mxu0 %v146
    %190 = vmatpush.msra.mxu0 %v144
    %191 = vmatpush.msra.mxu0 %v142
    %192 = vmatpush.msra.mxu0 %v140
    %193 = vmatmul.f32.gmra.mxu0 %v155
    %v194 = vpop.f32.mrf.mxu0
    %v195 = vadd.f32 %v150, %v194
    %196 = vdwg.mxu0
    %v197 = vmax.f32 %v175, 0.0
    %v198 = vmax.f32 %v195, 0.0
    %v199 = vld [vmem:[#allocation3] sm:$0xff]
    %v200 = vld [vmem:[#allocation3 + $0x8] sm:$0xff]
    %v201 = vld [vmem:[#allocation3 + $0x10] sm:$0xff]
    %v202 = vld [vmem:[#allocation3 + $0x18] sm:$0xff]
    %v203 = vld [vmem:[#allocation3 + $0x20] sm:$0xff]
    %v204 = vld [vmem:[#allocation3 + $0x28] sm:$0xff]
    %v205 = vld [vmem:[#allocation3 + $0x30] sm:$0xff]
    %v206 = vld [vmem:[#allocation3 + $0x38] sm:$0xff]
    %v207 = vld [vmem:[#allocation3 + $0x40] sm:$0xff]
    %v208 = vld [vmem:[#allocation3 + $0x48] sm:$0xff]
    %v209 = vld [vmem:[#allocation3 + $0x50] sm:$0xff]
    %v210 = vld [vmem:[#allocation3 + $0x58] sm:$0xff]
    %v211 = vld [vmem:[#allocation3 + $0x60] sm:$0xff]
    %v212 = vld [vmem:[#allocation3 + $0x68] sm:$0xff]
    %v213 = vld [vmem:[#allocation3 + $0x70] sm:$0xff]
    %v214 = vld [vmem:[#allocation3 + $0x78] sm:$0xff]
    %v215 = vld [vmem:[#allocation3 + $0x80] sm:$0xff]
    %v216 = vld [vmem:[#allocation3 + $0x88] sm:$0xff]
    %v217 = vld [vmem:[#allocation3 + $0x90] sm:$0xff]
    %v218 = vld [vmem:[#allocation3 + $0x98] sm:$0xff]
    %v219 = vld [vmem:[#allocation3 + $0xa0] sm:$0xff]
    %v220 = vld [vmem:[#allocation3 + $0xa8] sm:$0xff]
    %v221 = vld [vmem:[#allocation3 + $0xb0] sm:$0xff]
    %v222 = vld [vmem:[#allocation3 + $0xb8] sm:$0xff]
    %v223 = vld [vmem:[#allocation3 + $0xc0] sm:$0xff]
    %v224 = vld [vmem:[#allocation3 + $0xc8] sm:$0xff]
    %v225 = vld [vmem:[#allocation3 + $0xd0] sm:$0xff]
    %v226 = vld [vmem:[#allocation3 + $0xd8] sm:$0xff]
    %v227 = vld [vmem:[#allocation3 + $0xe0] sm:$0xff]
    %v228 = vld [vmem:[#allocation3 + $0xe8] sm:$0xff]
    %v229 = vld [vmem:[#allocation3 + $0xf0] sm:$0xff]
    %v230 = vld [vmem:[#allocation3 + $0xf8] sm:$0xff]
    %v231 = vld [vmem:[%s8] sm:$0x1]
    %v233 = vperm.slane %v231, 0
    %235 = vmatpush.msra.mxu0 %v214
    %236 = vmatpush.msra.mxu0 %v213
    %237 = vmatpush.msra.mxu0 %v212
    %238 = vmatpush.msra.mxu0 %v211
    %239 = vmatpush.msra.mxu0 %v210
    %240 = vmatpush.msra.mxu0 %v209
    %241 = vmatpush.msra.mxu0 %v208
    %242 = vmatpush.msra.mxu0 %v207
    %243 = vmatpush.msra.mxu0 %v206
    %244 = vmatpush.msra.mxu0 %v205
    %245 = vmatpush.msra.mxu0 %v204
    %246 = vmatpush.msra.mxu0 %v203
    %247 = vmatpush.msra.mxu0 %v202
    %248 = vmatpush.msra.mxu0 %v201
    %249 = vmatpush.msra.mxu0 %v200
    %250 = vmatpush.msra.mxu0 %v199
    %251 = vmatmul.f32.gmra.mxu0 %v197
    %v252 = vpop.f32.mrf.mxu0
    %v253 = vadd.f32 %v233, %v252
    %254 = vdwg.mxu0
    %255 = vmatpush.msra.mxu0 %v230
    %256 = vmatpush.msra.mxu0 %v229
    %257 = vmatpush.msra.mxu0 %v228
    %258 = vmatpush.msra.mxu0 %v227
    %259 = vmatpush.msra.mxu0 %v226
    %260 = vmatpush.msra.mxu0 %v225
    %261 = vmatpush.msra.mxu0 %v224
    %262 = vmatpush.msra.mxu0 %v223
    %263 = vmatpush.msra.mxu0 %v222
    %264 = vmatpush.msra.mxu0 %v221
    %265 = vmatpush.msra.mxu0 %v220
    %266 = vmatpush.msra.mxu0 %v219
    %267 = vmatpush.msra.mxu0 %v218
    %268 = vmatpush.msra.mxu0 %v217
    %269 = vmatpush.msra.mxu0 %v216
    %270 = vmatpush.msra.mxu0 %v215
    %271 = vmatmul.f32.gmra.mxu0 %v198
    %v272 = vpop.f32.mrf.mxu0
    %v273 = vadd.f32 %v253, %v272
    %274 = vdwg.mxu0
    %v275 = vmax.f32 %v273, 0.0
    %v276 = vld [vmem:[%s9] sm:$0x1]
    %v278 = vperm.slane %v276, 0
    %v280 = vmul.f32 %v275, %v278
    %281 = vadd.xlane.f32.xlu0 %v280
    %v282 = vpop.xlane.xlu0 %281
    %v283 = vld [vmem:[#allocation2] sm:$0x1]
    %v285 = vperm.slane %v283, 0
    %v287 = vadd.f32 %v282, %v285
    %v288 = vxor.u32 %v287, 2147483648
    %v289 = vmul.f32 %v288, 1.442695
    %v290 = vpow.pop %v289
    %v291 = vadd.f32 %v290, 1.0
    %v292 = vrcp.pop %v291
    %v293 = vmul.f32 %v291, %v292
    %v294 = vsub.f32 1.0, %v293
    %v295 = vmul.f32 %v292, %v294
    %v296 = vadd.f32 %v292, %v295
    %vm297 = vweird.f32 %v291
    %vm298 = vweird.f32 %v292
    %vm299 = vmor %vm297, %vm298
    %v300 = vsel %vm299, %v292, %v296
    %v301 = vand.u32 2147483647, %v291
    %vm302 = vcmp.eq.f32.partialorder %v301, 8.507059e+37
    %v303 = vand.u32 %v291, 2147483648
    %v304 = vor.u32 1.1754944e-38, %v303
    %v305 = vsel %vm302, %v304, %v300
    %v306 = vmul.f32 1.0, %v305
    %308 = vset.pattern.permute.xlu0 0
    %309 = vperm.xlu0 %308, %v306
    %v310 = vpop.permute.xlu0 %309
    %312 = vst [vmem:[%s11] sm:$0xff] %v310
    // Predicated region
    $region50: #{finetune_forward.1} parent=1 // pred_check
      _
    $region51: #{finetune_forward.1} parent=1 // pred_check_branch
      %314 = sbr.rel (0) target = $region53
    $region52: #{finetune_forward.1} parent=1 // pred_region
      _
    $region53: #{finetune_forward.1} parent=1 // pred_fallthru
      _
    // Predicated region
    $region54: #{finetune_forward.1} parent=1 // pred_check
      _
    $region55: #{finetune_forward.1} parent=1 // pred_check_branch
      %316 = sbr.rel (0) target = $region57
    $region56: #{finetune_forward.1} parent=1 // pred_region
      _
    $region57: #{finetune_forward.1} parent=1 // pred_fallthru
      _
    %317 = vsyncpa [#allocation4], 1

</llo_original>
